<compile_context>
chip_gen: v5e
topology: v5e:2x2
jax: 0.10.0
libtpu: 0.0.40
codegen_flags: <defaults>
</compile_context>

<pallas_src>
import functools

import jax
import jax.numpy as jnp
from jax import lax
from jax import image as jax_image
from jax.experimental import pallas as pl
from jax.experimental.pallas import tpu as pltpu

_SUBLANE = 8  # float32 sublane tile


# ----------------------------------------------------------------------------
# Fused kernel: upsample matmul + skip add + im2col 3x3 conv matmul + BN + ReLU
# ----------------------------------------------------------------------------
def _upsample_blend_kernel(x_ref, skip_ref, upmat_ref, w_ref, o_ref, patch_ref,
                           *, b_imgs, c_pad, out_h, out_w):
    """One batch shard (b_imgs images).

    x_ref    : (B*Cp, hw_in)        low-res input, spatial on lanes (mxu dtype)
    skip_ref : (B*Cp, hw_out)       skip connection, spatial on lanes (f32)
    upmat_ref: (hw_in, hw_out)      bilinear (align_corners=False) matrix^T
    w_ref    : (Op, 9*Cp + 8)       conv weights, im2col layout, BN scale folded
                                    in, BN shift in column 9*Cp (ones-row fold)
    o_ref    : (B*Op, hw_out)       output, lane- and sublane-dense store
    patch_ref: (B, 9*Cp + 8, hw)    VMEM scratch: im2col slab per image
    """
    hw = out_h * out_w

    # --- bilinear upsample as ONE MXU matmul, then skip add (f32 accumulate) --
    up = jnp.dot(x_ref[...], upmat_ref[...],
                 preferred_element_type=jnp.float32)            # (B*Cp, hw)
    z = up + skip_ref[...].astype(jnp.float32)                  # (B*Cp, hw)

    # --- boundary masks: 4 compares hoisted once, composed per tap -----------
    pos = lax.broadcasted_iota(jnp.int32, (1, hw), 1)
    row = pos // out_w
    col = pos - row * out_w
    row_ok = {-1: row >= 1, 0: None, 1: row < out_h - 1}
    col_ok = {-1: col >= 1, 0: None, 1: col < out_w - 1}

    # --- im2col: 9 lane-rolls streamed into the VMEM patch slab --------------
    # pltpu.roll follows np.roll semantics (out[i] = in[i - shift]); shift by
    # (-s) % hw gives tap[p] = z[p + s].  Rolls never mix images (batch is on
    # sublanes) and the boundary masks zero every wrap-around tap.
    taps = [(dh, dw) for dh in (-1, 0, 1) for dw in (-1, 0, 1)]
    for t, (dh, dw) in enumerate(taps):
        s = dh * out_w + dw
        tap = z if s == 0 else pltpu.roll(z, (-s) % hw, axis=1)
        if dh != 0 and dw != 0:
            mask = row_ok[dh] & col_ok[dw]
        elif dh != 0:
            mask = row_ok[dh]
        elif dw != 0:
            mask = col_ok[dw]
        else:
            mask = None
        if mask is not None:
            tap = jnp.where(mask, tap, 0.0)
        tap = tap.astype(patch_ref.dtype)
        for b in range(b_imgs):
            patch_ref[b, t * c_pad:(t + 1) * c_pad, :] = \
                tap[b * c_pad:(b + 1) * c_pad, :]

    # Constant-ones rows: the bias (BN shift) is folded into the weight column
    # at index 9*Cp, so no masked (O,1) bias load is needed.
    ones = jnp.ones((_SUBLANE, hw), patch_ref.dtype)
    for b in range(b_imgs):
        patch_ref[b, 9 * c_pad:, :] = ones

    # --- per-image conv (+ folded BN) matmul, then ReLU ----------------------
    w = w_ref[...]
    outs = [jnp.dot(w, patch_ref[b], preferred_element_type=jnp.float32)
            for b in range(b_imgs)]                              # each (Op, hw)
    out = outs[0] if b_imgs == 1 else jnp.concatenate(outs, axis=0)
    o_ref[...] = jnp.maximum(out, 0.0).astype(o_ref.dtype)


# ----------------------------------------------------------------------------
# Host-side helpers
# ----------------------------------------------------------------------------
def _interp_matrix(out_size, in_size):
    """1-D bilinear resize matrix, PyTorch align_corners=False semantics."""
    i = jnp.arange(out_size, dtype=jnp.float32)
    src = jnp.maximum((i + 0.5) * (in_size / out_size) - 0.5, 0.0)
    lo = jnp.clip(jnp.floor(src).astype(jnp.int32), 0, in_size - 1)
    hi = jnp.minimum(lo + 1, in_size - 1)
    w_hi = src - lo.astype(jnp.float32)
    w_lo = 1.0 - w_hi
    rows = jnp.arange(out_size)
    mat = jnp.zeros((out_size, in_size), jnp.float32)
    mat = mat.at[rows, lo].add(w_lo)
    mat = mat.at[rows, hi].add(w_hi)
    return mat


def _default_batch_shards(n):
    """2 grid steps on dual-TensorCore parts (v7x) so both cores get equal
    work under dimension_semantics=("parallel",); a single step on 1-TC parts
    (v5e/v6e), which removes all but one fixed per-step overhead."""
    try:
        kind = jax.devices()[0].device_kind.lower()
    except Exception:
        kind = ""
    if n >= 2 and n % 2 == 0 and ("v7" in kind or "tpu7" in kind):
        return 2
    return 1


def upsample_blend(x, skip, conv_w, gamma, beta, running_mean, running_var, *,
                   eps=1e-5, mxu_dtype=jnp.bfloat16, batch_shards=None):
    """_UpsampleBlend forward (defaults: use_skip=True, use_bn=True, k=3,
    separable=False, fixed_size=None).  NCHW in, NCHW out."""
    n, c, h_in, w_in = x.shape
    n2, c2, h_out, w_out = skip.shape
    o = conv_w.shape[0]
    assert (n, c) == (n2, c2) and conv_w.shape == (o, c, 3, 3)

    hw_in = h_in * w_in
    hw_out = h_out * w_out
    c_pad = -(-c // _SUBLANE) * _SUBLANE   # pad channels to the sublane tile
    o_pad = -(-o // _SUBLANE) * _SUBLANE   # pad out-channels -> dense stores

    if batch_shards is None:
        batch_shards = _default_batch_shards(n)
    assert n % batch_shards == 0, (n, batch_shards)
    b_imgs = n // batch_shards

    # Bilinear (align_corners=False) upsample folded into one matrix (see TODO
    # above about the separable form for very large feature maps).
    up_mat_t = jnp.kron(_interp_matrix(h_out, h_in),
                        _interp_matrix(w_out, w_in)).T.astype(mxu_dtype)

    # Eval-mode BN folded into the conv: scale into the weights, shift into an
    # extra weight column that multiplies a constant-ones row of the im2col.
    s = gamma / jnp.sqrt(running_var + eps)
    bias = beta - running_mean * s                               # (o,)

    if c_pad != c:
        x = jnp.pad(x, ((0, 0), (0, c_pad - c), (0, 0), (0, 0)))
        skip = jnp.pad(skip, ((0, 0), (0, c_pad - c), (0, 0), (0, 0)))
        conv_w = jnp.pad(conv_w, ((0, 0), (0, c_pad - c), (0, 0), (0, 0)))

    # im2col weight layout: w[o, (kh*3+kw)*Cp + ci] = s[o] * conv_w[o, ci, kh, kw]
    conv_ws = conv_w.astype(jnp.float32) * s[:, None, None, None]
    w_im2col = jnp.transpose(conv_ws, (0, 2, 3, 1)).reshape(o, 9 * c_pad)
    if o_pad != o:
        w_im2col = jnp.pad(w_im2col, ((0, o_pad - o), (0, 0)))
    bias_cols = jnp.zeros((o_pad, _SUBLANE), jnp.float32).at[:o, 0].set(bias)
    w_full = jnp.concatenate([w_im2col, bias_cols], axis=1).astype(mxu_dtype)
    k_dim = 9 * c_pad + _SUBLANE

    # NCHW -> (N*Cp, H*W): free reshapes, spatial on the lane axis.  The MXU
    # operands (x, upmat, weights) are cast to mxu_dtype; skip stays f32 and is
    # added to the f32 accumulator.
    x_flat = x.reshape(n * c_pad, hw_in).astype(mxu_dtype)
    skip_flat = skip.reshape(n * c_pad, hw_out)

    kernel = functools.partial(_upsample_blend_kernel, b_imgs=b_imgs,
                               c_pad=c_pad, out_h=h_out, out_w=w_out)

    out_flat = pl.pallas_call(
        kernel,
        out_shape=jax.ShapeDtypeStruct((n * o_pad, hw_out), skip.dtype),
        grid_spec=pltpu.PrefetchScalarGridSpec(
            num_scalar_prefetch=0,
            grid=(batch_shards,),
            in_specs=[
                pl.BlockSpec((b_imgs * c_pad, hw_in), lambda g: (g, 0)),
                pl.BlockSpec((b_imgs * c_pad, hw_out), lambda g: (g, 0)),
                pl.BlockSpec((hw_in, hw_out), lambda g: (0, 0)),
                pl.BlockSpec((o_pad, k_dim), lambda g: (0, 0)),
            ],
            out_specs=pl.BlockSpec((b_imgs * o_pad, hw_out), lambda g: (g, 0)),
            scratch_shapes=[pltpu.VMEM((b_imgs, k_dim, hw_out), mxu_dtype)],
        ),
        compiler_params=pltpu.CompilerParams(
            dimension_semantics=("parallel",)),
    )(x_flat, skip_flat, up_mat_t, w_full)

    out = out_flat.reshape(n, o_pad, h_out, w_out)
    if o_pad != o:
        out = out[:, :o]
    return out


# ----------------------------------------------------------------------------
# Pure-JAX reference (independent code path: jax.image.resize + lax conv)
# ----------------------------------------------------------------------------
def _reference(x, skip, conv_w, gamma, beta, running_mean, running_var, eps=1e-5):
    n, c, _, _ = x.shape
    h_out, w_out = skip.shape[-2:]
    up = jax_image.resize(x, (n, c, h_out, w_out), method="bilinear")
    z = up + skip
    y = lax.conv_general_dilated(
        z, conv_w, window_strides=(1, 1), padding=[(1, 1), (1, 1)],
        dimension_numbers=("NCHW", "OIHW", "NCHW"))
    s = gamma / jnp.sqrt(running_var + eps)
    y = y * s[None, :, None, None] + (beta - running_mean * s)[None, :, None, None]
    return jnp.maximum(y, 0.0)


# ----------------------------------------------------------------------------
# Unit test: pin pltpu.roll to np.roll semantics (review: no runtime probe,
# no silent jnp.roll fallback -- fail loudly instead).
# ----------------------------------------------------------------------------
def _assert_roll_convention():
    def probe_kernel(x_ref, o_ref):
        o_ref[...] = pltpu.roll(x_ref[...], 3, axis=1)

    probe = jnp.broadcast_to(
        jnp.arange(128, dtype=jnp.float32)[None, :], (8, 128))
    got = pl.pallas_call(
        probe_kernel,
        out_shape=jax.ShapeDtypeStruct((8, 128), jnp.float32))(probe)
    want = jnp.roll(probe, 3, axis=1)
    assert bool(jnp.array_equal(got, want)), (
        "pltpu.roll does not follow np.roll semantics on this toolchain; the "
        "im2col lane shifts in _upsample_blend_kernel assume out[i]=in[i-shift].")


if __name__ == "__main__":
    _assert_roll_convention()

    # _UpsampleBlend(num_features=4): x is the low-res decoder feature,
    # skip is the higher-res encoder feature.
    N, C = 2, 4
    H_IN, W_IN = 8, 8
    H_OUT, W_OUT = 16, 16

    key = jax.random.PRNGKey(0)
    kx, ks, kw, kg, kb, km, kv = jax.random.split(key, 7)
    x = jax.random.normal(kx, (N, C, H_IN, W_IN), dtype=jnp.float32)
    skip = jax.random.normal(ks, (N, C, H_OUT, W_OUT), dtype=jnp.float32)
    conv_w = jax.random.normal(kw, (C, C, 3, 3), dtype=jnp.float32) * 0.1
    gamma = jax.random.uniform(kg, (C,), dtype=jnp.float32, minval=0.5, maxval=1.5)
    beta = jax.random.normal(kb, (C,), dtype=jnp.float32) * 0.1
    run_mean = jax.random.normal(km, (C,), dtype=jnp.float32) * 0.1
    run_var = jax.random.uniform(kv, (C,), dtype=jnp.float32, minval=0.5, maxval=1.5)

    ref = _reference(x, skip, conv_w, gamma, beta, run_mean, run_var)
    assert ref.shape == (N, C, H_OUT, W_OUT)

    # 1) f32 MXU operands, single grid step: tight check of the fused math.
    out_f32 = upsample_blend(x, skip, conv_w, gamma, beta, run_mean, run_var,
                             mxu_dtype=jnp.float32, batch_shards=1)
    out_f32 = jax.block_until_ready(out_f32)
    assert out_f32.shape == ref.shape
    err = float(jnp.max(jnp.abs(out_f32 - ref)))
    assert jnp.allclose(out_f32, ref, atol=1e-4, rtol=1e-4), err

    # 2) f32 operands, 2 batch shards: validates the v7x dual-TensorCore path.
    out_sh = upsample_blend(x, skip, conv_w, gamma, beta, run_mean, run_var,
                            mxu_dtype=jnp.float32, batch_shards=2)
    out_sh = jax.block_until_ready(out_sh)
    err_sh = float(jnp.max(jnp.abs(out_sh - ref)))
    assert jnp.allclose(out_sh, ref, atol=1e-4, rtol=1e-4), err_sh

    # 3) Production default: bf16 MXU operands, auto shard count.
    out_bf = upsample_blend(x, skip, conv_w, gamma, beta, run_mean, run_var)
    out_bf = jax.block_until_ready(out_bf)
    err_bf = float(jnp.max(jnp.abs(out_bf - ref)))
    assert jnp.allclose(out_bf, ref, atol=1e-1, rtol=1e-1), err_bf

    print("KERNEL_OK")
</pallas_src>

<mosaic_0001>
module attributes {stable_mosaic.version = 11 : i64} {
  func.func @probe_kernel(%arg0: memref<8x128xf32, #tpu.memory_space<vmem>>, %arg1: memref<8x128xf32, #tpu.memory_space<vmem>>) attributes {dimension_semantics = [], scalar_prefetch = 0 : i64, scratch_operands = 0 : i64, tpu.core_type = #tpu.core_type<tc>} {
    %c0 = arith.constant 0 : index
    %c0_0 = arith.constant 0 : index
    %0 = vector.load %arg0[%c0, %c0_0] : memref<8x128xf32, #tpu.memory_space<vmem>>, vector<8x128xf32>
    %c3_i32 = arith.constant 3 : i32
    %1 = tpu.dynamic_rotate %0 by %c3_i32 dim 1 : vector<8x128xf32>, i32 -> vector<8x128xf32>
    %c0_1 = arith.constant 0 : index
    %c0_2 = arith.constant 0 : index
    %2 = vector.load %arg1[%c0_1, %c0_2] : memref<8x128xf32, #tpu.memory_space<vmem>>, vector<8x128xf32>
    tpu.vector_store %arg1[%c0_1, %c0_2], %1 {strides = array<i32>} : memref<8x128xf32, #tpu.memory_space<vmem>>, vector<8x128xf32>,
    return
  }
}

</mosaic_0001>

<llo_original>
// kernel: tpu_custom_call.1
$region0: #{tpu_custom_call.1}
  #allocation0 [shape = 'u32[]', space=smem, size = 0x4, offset = 0x4, fixed_abs, tag = 'smem constant byte address 0x4 - core index']
  #allocation1 [shape = 'u32[72,128]{1,0:T(1,128)}', space=vmem, size = 0x9000, scoped, tag = 'internal scratch']
  %s0 = inlined_call_operand.hbm [shape: f32[8,128], index: 0, kind: input, shape index: {}]
  %s1 = inlined_call_operand.hbm [shape: f32[8,128], index: 1, kind: output, shape index: {}]
  %s2 = sld [smem:[#allocation0]]
  $region18: #{tpu_custom_call.1} parent=0
    _
  %s4 = ssub.s32 1, %s2
  %s5 = scalar_select 0, %s4, %s2
  $region1: #{tpu_custom_call.1} parent=0
    #allocation2 [shape = 'u8[4096]{0}', space=vmem, size = 0x1000, scoped, tag = 'input window, operand 0, single buffered']
    #allocation3 [shape = 's32[1]{0}', space=sflag, size = 0x4, scoped, tag = 'scoped memory for tpu_custom_call.1']
    #allocation4 [shape = 's32[1]{0}', space=sflag, size = 0x4, scoped, tag = 'scoped memory for tpu_custom_call.1']
    #allocation5 [shape = 'u8[4096]{0}', space=vmem, size = 0x1000, scoped, tag = 'output window, operand 0, single buffered']
    %6 = vsyncpa [#allocation3], 0
    %7 = vsyncpa [#allocation4], 0
    // Predicated region
    $region2: #{tpu_custom_call.1} parent=1 // pred_check
      _
    $region3: #{tpu_custom_call.1} parent=1 // pred_check_branch
      %9 = sbr.rel (0) target = $region5
    $region4: #{tpu_custom_call.1} parent=1 // pred_region
      %11 = vsyncadd [#allocation3], 0
      %s13 = sshll.u32 %s0, 4
      %s14 = int_to_ptr.hbm [resolvable:$true] %s13
      %s15 = sshll.u32 [#allocation2], 4
      %s16 = int_to_ptr.vmem [resolvable:$true] %s15
      %18 = dma.hbm_to_vmem [thread:$0]  %s14, 128, %s16, [#allocation3]
    $region5: #{tpu_custom_call.1} parent=1 // pred_fallthru
      _
    // Predicated region
    $region6: #{tpu_custom_call.1} parent=1 // pred_check
      _
    $region7: #{tpu_custom_call.1} parent=1 // pred_check_branch
      %20 = sbr.rel (0) target = $region9
    $region8: #{tpu_custom_call.1} parent=1 // pred_region
      %22 = dma.done [#allocation3], 128
    $region9: #{tpu_custom_call.1} parent=1 // pred_fallthru
      _
    %v23 = vld [vmem:[#allocation2] sm:$0xff]
    %24 = vrot.lane.b32.xlu0 %v23, 3
    %v25 = vpop.permute.xlu0 %24
    %26 = vst [vmem:[#allocation5] sm:$0xff] %v25
    // Predicated region
    $region10: #{tpu_custom_call.1} parent=1 // pred_check
      _
    $region11: #{tpu_custom_call.1} parent=1 // pred_check_branch
      %28 = sbr.rel (0) target = $region13
    $region12: #{tpu_custom_call.1} parent=1 // pred_region
      %30 = vsyncadd [#allocation4], 0
      %s32 = sshll.u32 [#allocation5], 4
      %s33 = int_to_ptr.vmem [resolvable:$true] %s32
      %s34 = sshll.u32 %s1, 4
      %s35 = int_to_ptr.hbm [resolvable:$true] %s34
      %37 = dma.vmem_to_hbm [thread:$0]  %s33, 128, %s35, [#allocation4]
    $region13: #{tpu_custom_call.1} parent=1 // pred_fallthru
      _
    // Predicated region
    $region14: #{tpu_custom_call.1} parent=1 // pred_check
      _
    $region15: #{tpu_custom_call.1} parent=1 // pred_check_branch
      %39 = sbr.rel (0) target = $region17
    $region16: #{tpu_custom_call.1} parent=1 // pred_region
      %41 = dma.done [#allocation4], 128
    $region17: #{tpu_custom_call.1} parent=1 // pred_fallthru
      _
    %42 = vsyncpa [#allocation3], 1
    %43 = vsyncpa [#allocation4], 1

</llo_original>
